<compile_context>
chip_gen: v7x
topology: tpu7x:2x2x1
jax: 0.10.0
libtpu: 0.0.40
codegen_flags: <defaults>
</compile_context>

<pallas_src>
import functools

import jax
import jax.numpy as jnp
from jax.experimental import pallas as pl
from jax.experimental.pallas import tpu as pltpu


def _rowsum_kernel(map_ref, out_ref, rowsum_ref, *,
                   grid_d, grid_d_core, tile_n, tile_d, d_true,
                   lane_fold, mask_tail, has_phantom):
    """Streams map tiles and accumulates lane-partial row sums.

    The output block (tile_n, 128) for this (core, n-block) holds partial row
    sums spread across 128 lanes; the wrapper epilogue sums lanes and cores.
    """
    c = pl.program_id(0)                     # core-split index (v7x megacore)
    k = pl.program_id(2)                     # D sweep within this core's range
    gk = c * grid_d_core + k                 # global D-block index

    # Start of this (core, n-block) sweep: zero the lane-parallel accumulator.
    @pl.when(k == 0)
    def _init():
        rowsum_ref[...] = jnp.zeros_like(rowsum_ref)

    def _accum(tile_f32):
        if lane_fold:
            # Lane-parallel accumulation: fold 128-lane column groups with
            # plain VPU adds (static lane-aligned slices -> no relayout, no
            # per-step XLU reduce, no masked 1-lane store).
            acc = tile_f32[:, 0:128]
            for j in range(1, tile_d // 128):
                acc = acc + tile_f32[:, j * 128:(j + 1) * 128]
            rowsum_ref[...] += acc
        else:
            # Fallback (D not a multiple of 128, single-block case; or very
            # wide tiles): one reduce per step, deposited into lane 0 via a
            # full-width select so the store stays unmasked.
            part = jnp.sum(tile_f32, axis=1, keepdims=True)        # [tile_n,1]
            lane = jax.lax.broadcasted_iota(jnp.int32, (tile_n, 128), 1)
            rowsum_ref[...] += jnp.where(lane == 0, part, 0.0)

    if mask_tail:
        # Interior D blocks: unmasked accumulate (mask cost only on the one
        # ragged tail block, per review).  Phantom blocks (gk >= grid_d) from
        # an uneven core split satisfy neither condition and are skipped.
        @pl.when(gk < grid_d - 1)
        def _interior():
            _accum(map_ref[...].astype(jnp.float32))

        @pl.when(gk == grid_d - 1)
        def _tail():
            tile = map_ref[...].astype(jnp.float32)
            col = jax.lax.broadcasted_iota(jnp.int32, (tile_n, tile_d), 1)
            valid = d_true - (grid_d - 1) * tile_d                 # python int
            _accum(jnp.where(col < valid, tile, 0.0))
    elif has_phantom:
        @pl.when(gk < grid_d)                 # skip phantom blocks of the split
        def _real():
            _accum(map_ref[...].astype(jnp.float32))
    else:
        _accum(map_ref[...].astype(jnp.float32))

    # End of this (core, n-block) sweep: emit the lane-partial row sums with a
    # single full-width (lane-dense) store.
    @pl.when(k == grid_d_core - 1)
    def _emit():
        out_ref[...] = rowsum_ref[...]


def _vmem_budget():
    """Generation-aware map-tile budget and scoped-VMEM limit."""
    tile_budget = 12 * 1024 * 1024            # safe for v7x (64 MiB VMEM / TC)
    vmem_limit = 44 * 1024 * 1024
    cap = 0
    try:
        cap = int(pltpu.get_tpu_info().vmem_capacity_bytes)
    except Exception:
        cap = 0
    kind = ""
    try:
        kind = jax.devices()[0].device_kind.lower()
    except Exception:
        kind = ""
    if cap >= 100 * 1024 * 1024 and "v7" not in kind:  # v4/v5e/v6e: 128 MiB VMEM
        tile_budget = 16 * 1024 * 1024
        vmem_limit = 56 * 1024 * 1024
    return tile_budget, vmem_limit


def _choose_tiles(N, D, itemsize, tile_budget):
    """Biggest tiles that fit the budget, honoring (sublane,128) legality."""
    tile_n = N if N <= 256 else 256           # full dim, or multiple of 8/16/32
    budget_elems = max(128, tile_budget // max(1, tile_n * itemsize))
    if D <= budget_elems:
        tile_d = D                            # single D block (full-dim legal)
    else:
        tile_d = max(128, (budget_elems // 128) * 128)   # multiple of 128
    return tile_n, tile_d


def icnet_loss(cls_score_map, cls_score_vec, label, *, num_scores,
               map_weighting=0.1, tile_n=None, tile_d=None):
    """cls_score_map: [N, C, H, W]; cls_score_vec: [N, 1] (or [N]); label: [N]."""
    N = int(cls_score_map.shape[0])
    D = 1
    for s in cls_score_map.shape[1:]:
        D *= int(s)

    # Free reshape; the big map streams through the kernel in its NATIVE dtype
    # (minimum HBM bytes for bf16 pipelines).
    map_flat = cls_score_map.reshape(N, D)
    itemsize = jnp.dtype(map_flat.dtype).itemsize
    sub_min = {4: 8, 2: 16, 1: 32}.get(itemsize, 8)     # dtype-aware sublane min

    tile_budget, vmem_limit = _vmem_budget()
    auto_tn, auto_td = _choose_tiles(N, D, itemsize, tile_budget)
    tile_n = auto_tn if tile_n is None else int(tile_n)
    tile_d = auto_td if tile_d is None else int(tile_d)
    assert tile_n == N or tile_n % sub_min == 0, (
        f"tile_n must be N or a multiple of {sub_min} for this dtype")
    assert tile_d == D or tile_d % 128 == 0, "tile_d must be D or a multiple of 128"

    grid_n = pl.cdiv(N, tile_n)
    grid_d = pl.cdiv(D, tile_d)

    # v7x: split the memory-bound D sweep across the 2 TensorCores via a
    # leading "parallel" grid axis (harmless / sequential on 1-TC chips).
    ncore = 2 if grid_d >= 2 else 1
    grid_d_core = pl.cdiv(grid_d, ncore)
    has_phantom = ncore * grid_d_core > grid_d

    lane_fold = (tile_d % 128 == 0) and (tile_d // 128 <= 256)
    mask_tail = (D % tile_d) != 0

    kernel = functools.partial(
        _rowsum_kernel,
        grid_d=grid_d, grid_d_core=grid_d_core,
        tile_n=tile_n, tile_d=tile_d, d_true=D,
        lane_fold=lane_fold, mask_tail=mask_tail, has_phantom=has_phantom)

    out_rows = grid_n * tile_n
    cost = pl.CostEstimate(
        flops=2 * N * D, transcendentals=0,
        bytes_accessed=N * D * itemsize + out_rows * ncore * 128 * 4)

    def _map_index(c, i, k):
        # Contiguous per-core D ranges; clamp phantom blocks of an uneven core
        # split onto the last real block (their contribution is skipped).
        return (i, jnp.minimum(c * grid_d_core + k, grid_d - 1))

    partial = pl.pallas_call(
        kernel,
        out_shape=jax.ShapeDtypeStruct((out_rows, ncore * 128), jnp.float32),
        grid=(ncore, grid_n, grid_d_core),
        in_specs=[pl.BlockSpec((tile_n, tile_d), _map_index)],
        out_specs=pl.BlockSpec((tile_n, 128), lambda c, i, k: (i, c)),
        scratch_shapes=[pltpu.VMEM((tile_n, 128), jnp.float32)],
        compiler_params=pltpu.CompilerParams(
            dimension_semantics=("parallel", "arbitrary", "arbitrary"),
            vmem_limit_bytes=vmem_limit),
        cost_estimate=cost,
    )(map_flat)

    # O(N) finalize in XLA (per review): combine per-core lane-partial row
    # sums, take the true means, then the two scaled MSEs and their weighting.
    rowsum = jnp.sum(partial[:N, :], axis=1)                       # [N]
    score2 = rowsum * jnp.float32(1.0 / D)
    score1 = jnp.reshape(cls_score_vec, (N,)).astype(jnp.float32)  # .squeeze()
    lab = jnp.reshape(label, (N,)).astype(jnp.float32)
    scale = jnp.float32(float(num_scores) - 1.0)
    d1 = (score1 - lab) * scale
    d2 = (score2 - lab) * scale
    loss1 = jnp.mean(d1 * d1)
    loss2 = jnp.mean(d2 * d2)
    w = jnp.float32(float(map_weighting))
    return (jnp.float32(1.0) - w) * loss1 + w * loss2


def icnet_loss_ref(cls_score_map, cls_score_vec, label, *, num_scores,
                   map_weighting=0.1):
    """Pure-JAX reference mirroring the PyTorch forward."""
    scale = float(num_scores) - 1.0
    n = cls_score_map.shape[0]
    score1 = jnp.reshape(cls_score_vec, (n,)).astype(jnp.float32)
    score2 = jnp.mean(cls_score_map.astype(jnp.float32), axis=(1, 2, 3))
    lab = jnp.reshape(label, (n,)).astype(jnp.float32)
    loss1 = jnp.mean((score1 * scale - lab * scale) ** 2)
    loss2 = jnp.mean((score2 * scale - lab * scale) ** 2)
    return (1.0 - map_weighting) * loss1 + map_weighting * loss2


if __name__ == "__main__":
    key = jax.random.PRNGKey(0)
    keys = jax.random.split(key, 16)
    num_scores = 5
    mw = 0.1

    def check(m, v, l, **kw):
        out = icnet_loss(m, v, l, num_scores=num_scores, map_weighting=mw, **kw)
        out = jax.block_until_ready(out)
        ref = icnet_loss_ref(m, v, l, num_scores=num_scores, map_weighting=mw)
        assert jnp.allclose(out, ref, rtol=1e-5, atol=1e-5), (out, ref)

    # 1) small f32, auto tiles (single block per axis).
    m = jax.random.uniform(keys[0], (2, 4, 16, 16), dtype=jnp.float32)
    v = jax.random.uniform(keys[1], (2, 1), dtype=jnp.float32)
    l = jax.random.uniform(keys[2], (2,), dtype=jnp.float32)
    check(m, v, l)

    # 2) forced small tile_d -> multi-step D sweep, 2-way core split with a
    #    phantom block, and a ragged (masked) tail D block.
    m = jax.random.uniform(keys[3], (8, 4, 16, 16), dtype=jnp.float32)
    v = jax.random.uniform(keys[4], (8, 1), dtype=jnp.float32)
    l = jax.random.uniform(keys[5], (8,), dtype=jnp.float32)
    check(m, v, l, tile_n=8, tile_d=384)

    # 3) uneven N (ragged last row block, sliced off in the epilogue).
    m = jax.random.uniform(keys[6], (10, 4, 16, 16), dtype=jnp.float32)
    v = jax.random.uniform(keys[7], (10, 1), dtype=jnp.float32)
    l = jax.random.uniform(keys[8], (10,), dtype=jnp.float32)
    check(m, v, l, tile_n=8)

    # 4) bf16 map streamed in its native dtype (sublane-16 tiling path).
    m = jax.random.uniform(keys[9], (16, 4, 16, 16),
                           dtype=jnp.float32).astype(jnp.bfloat16)
    v = jax.random.uniform(keys[10], (16, 1), dtype=jnp.float32)
    l = jax.random.uniform(keys[11], (16,), dtype=jnp.float32)
    check(m, v, l)

    # 5) D not a multiple of 128 (single full-D block, scalar-reduce fallback).
    m = jax.random.uniform(keys[12], (8, 3, 5, 5), dtype=jnp.float32)
    v = jax.random.uniform(keys[13], (8, 1), dtype=jnp.float32)
    l = jax.random.uniform(keys[14], (8,), dtype=jnp.float32)
    check(m, v, l)

    print("KERNEL_OK")
</pallas_src>

<mosaic_0001>
module attributes {stable_mosaic.version = 11 : i64} {
  func.func @_rowsum_kernel(%arg0: i32, %arg1: i32, %arg2: i32, %arg3: memref<2x1024xf32, #tpu.memory_space<vmem>>, %arg4: memref<2x128xf32, #tpu.memory_space<vmem>>, %arg5: memref<2x128xf32, #tpu.memory_space<vmem>>) attributes {dimension_semantics = [#tpu.dimension_semantics<parallel>, #tpu.dimension_semantics<arbitrary>, #tpu.dimension_semantics<arbitrary>], iteration_bounds = array<i64: 1, 1, 1>, scalar_prefetch = 0 : i64, scratch_operands = 1 : i64, tpu.core_type = #tpu.core_type<tc>, window_params = [{transform_indices = @transform_0, window_bounds = array<i64: 2, 1024>}, {transform_indices = @transform_1, window_bounds = array<i64: 2, 128>}]} {
    %c0_i32 = arith.constant 0 : i32
    %0 = arith.cmpi eq, %arg2, %c0_i32 : i32
    %1 = arith.extui %0 : i1 to i32
    %c0_i32_0 = arith.constant 0 : i32
    %2 = arith.cmpi ne, %1, %c0_i32_0 : i32
    scf.if %2 {
      %cst = arith.constant 0.000000e+00 : f32
      %25 = vector.broadcast %cst : f32 to vector<2x128xf32>
      %c0_8 = arith.constant 0 : index
      %c0_9 = arith.constant 0 : index
      %26 = vector.load %arg5[%c0_8, %c0_9] : memref<2x128xf32, #tpu.memory_space<vmem>>, vector<2x128xf32>
      tpu.vector_store %arg5[%c0_8, %c0_9], %25 {strides = array<i32>} : memref<2x128xf32, #tpu.memory_space<vmem>>, vector<2x128xf32>,
    } else {
    }
    %c0 = arith.constant 0 : index
    %c0_1 = arith.constant 0 : index
    %3 = vector.load %arg3[%c0, %c0_1] : memref<2x1024xf32, #tpu.memory_space<vmem>>, vector<2x1024xf32>
    %4 = vector.extract_strided_slice %3 {offsets = [0, 0], sizes = [2, 128], strides = [1, 1]} : vector<2x1024xf32> to vector<2x128xf32>
    %5 = vector.extract_strided_slice %3 {offsets = [0, 128], sizes = [2, 128], strides = [1, 1]} : vector<2x1024xf32> to vector<2x128xf32>
    %6 = arith.addf %4, %5 : vector<2x128xf32>
    %7 = vector.extract_strided_slice %3 {offsets = [0, 256], sizes = [2, 128], strides = [1, 1]} : vector<2x1024xf32> to vector<2x128xf32>
    %8 = arith.addf %6, %7 : vector<2x128xf32>
    %9 = vector.extract_strided_slice %3 {offsets = [0, 384], sizes = [2, 128], strides = [1, 1]} : vector<2x1024xf32> to vector<2x128xf32>
    %10 = arith.addf %8, %9 : vector<2x128xf32>
    %11 = vector.extract_strided_slice %3 {offsets = [0, 512], sizes = [2, 128], strides = [1, 1]} : vector<2x1024xf32> to vector<2x128xf32>
    %12 = arith.addf %10, %11 : vector<2x128xf32>
    %13 = vector.extract_strided_slice %3 {offsets = [0, 640], sizes = [2, 128], strides = [1, 1]} : vector<2x1024xf32> to vector<2x128xf32>
    %14 = arith.addf %12, %13 : vector<2x128xf32>
    %15 = vector.extract_strided_slice %3 {offsets = [0, 768], sizes = [2, 128], strides = [1, 1]} : vector<2x1024xf32> to vector<2x128xf32>
    %16 = arith.addf %14, %15 : vector<2x128xf32>
    %17 = vector.extract_strided_slice %3 {offsets = [0, 896], sizes = [2, 128], strides = [1, 1]} : vector<2x1024xf32> to vector<2x128xf32>
    %18 = arith.addf %16, %17 : vector<2x128xf32>
    %c0_2 = arith.constant 0 : index
    %c0_3 = arith.constant 0 : index
    %19 = vector.load %arg5[%c0_2, %c0_3] : memref<2x128xf32, #tpu.memory_space<vmem>>, vector<2x128xf32>
    %20 = arith.addf %19, %18 : vector<2x128xf32>
    %c0_4 = arith.constant 0 : index
    %c0_5 = arith.constant 0 : index
    %21 = vector.load %arg5[%c0_4, %c0_5] : memref<2x128xf32, #tpu.memory_space<vmem>>, vector<2x128xf32>
    tpu.vector_store %arg5[%c0_4, %c0_5], %20 {strides = array<i32>} : memref<2x128xf32, #tpu.memory_space<vmem>>, vector<2x128xf32>,
    %c0_i32_6 = arith.constant 0 : i32
    %22 = arith.cmpi eq, %arg2, %c0_i32_6 : i32
    %23 = arith.extui %22 : i1 to i32
    %c0_i32_7 = arith.constant 0 : i32
    %24 = arith.cmpi ne, %23, %c0_i32_7 : i32
    scf.if %24 {
      %c0_8 = arith.constant 0 : index
      %c0_9 = arith.constant 0 : index
      %25 = vector.load %arg5[%c0_8, %c0_9] : memref<2x128xf32, #tpu.memory_space<vmem>>, vector<2x128xf32>
      %c0_10 = arith.constant 0 : index
      %c0_11 = arith.constant 0 : index
      %26 = vector.load %arg4[%c0_10, %c0_11] : memref<2x128xf32, #tpu.memory_space<vmem>>, vector<2x128xf32>
      tpu.vector_store %arg4[%c0_10, %c0_11], %25 {strides = array<i32>} : memref<2x128xf32, #tpu.memory_space<vmem>>, vector<2x128xf32>,
    } else {
    }
    return
  }
  func.func @transform_0(%arg0: i32, %arg1: i32, %arg2: i32) -> (i32, i32) {
    %c1_i32 = arith.constant 1 : i32
    %0 = arith.muli %arg0, %c1_i32 : i32
    %1 = arith.addi %0, %arg2 : i32
    %c0_i32 = arith.constant 0 : i32
    %2 = arith.minsi %1, %c0_i32 : i32
    %c0_i32_0 = arith.constant 0 : i32
    return %arg1, %2 : i32, i32
  }
  func.func @transform_1(%arg0: i32, %arg1: i32, %arg2: i32) -> (i32, i32) {
    %c0_i32 = arith.constant 0 : i32
    return %arg1, %arg0 : i32, i32
  }
}

</mosaic_0001>

<llo_original>
// kernel: tpu_custom_call.1
$region0: #{tpu_custom_call.1}
  #allocation0 [shape = 'u32[]', space=smem, size = 0x4, offset = 0x4, fixed_abs, tag = 'smem constant byte address 0x4 - core index']
  #allocation1 [shape = 'u32[144,128]{1,0:T(1,128)}', space=vmem, size = 0x12000, scoped, tag = 'internal scratch']
  #allocation2 [shape = 'f32[2,128]{1,0:T(2,128)}', space=vmem, size = 0x400, scoped, tag = 'scratch operand']
  %s0 = inlined_call_operand.hbm [shape: f32[2,1024], index: 0, kind: input, shape index: {}]
  %s1 = inlined_call_operand.hbm [shape: f32[2,128], index: 1, kind: output, shape index: {}]
  %s2 = sld [smem:[#allocation0]]
  $region26: #{tpu_custom_call.1} parent=0
    _
  %s4 = ssub.s32 1, %s2
  %s5 = scalar_select 0, %s4, %s2
  $region1: #{tpu_custom_call.1} parent=0
    #allocation3 [shape = 'u8[8192]{0}', space=vmem, size = 0x2000, scoped, tag = 'input window, operand 0, single buffered']
    #allocation4 [shape = 's32[1]{0}', space=sflag, size = 0x4, scoped, tag = 'scoped memory for tpu_custom_call.1']
    #allocation5 [shape = 's32[1]{0}', space=sflag, size = 0x4, scoped, tag = 'scoped memory for tpu_custom_call.1']
    #allocation6 [shape = 'u8[1024]{0}', space=vmem, size = 0x400, scoped, tag = 'output window, operand 0, single buffered']
    %6 = vsyncpa [#allocation4], 0
    %7 = vsyncpa [#allocation5], 0
    // Predicated region
    $region2: #{tpu_custom_call.1} parent=1 // pred_check
      _
    $region3: #{tpu_custom_call.1} parent=1 // pred_check_branch
      %9 = sbr.rel (0) target = $region5
    $region4: #{tpu_custom_call.1} parent=1 // pred_region
      %s10 = sadd.s32 0, 0
      %p11 = scmp.lt.s32.totalorder %s10, 0
      %s12 = scalar_select %p11, %s10, 0
      %s13 = smul.u32 8, %s12
      %s15 = ssub.s32 256, 256
      %16 = vsyncadd [#allocation4], %s15
      %s17 = smul.addr %s13, 32
      %s18 = scalar_lea.hbm %s0, %s17
      %s20 = sshll.u32 [#allocation3], 4
      %s21 = int_to_ptr.vmem [resolvable:$true] %s20
      %23 = dma.hbm_to_vmem [thread:$0]  %s18, 256, %s21, [#allocation4]
    $region5: #{tpu_custom_call.1} parent=1 // pred_fallthru
      _
    // Predicated region
    $region6: #{tpu_custom_call.1} parent=1 // pred_check
      _
    $region7: #{tpu_custom_call.1} parent=1 // pred_check_branch
      %25 = sbr.rel (0) target = $region9
    $region8: #{tpu_custom_call.1} parent=1 // pred_region
      %26 = dma.done [#allocation4], 256
    $region9: #{tpu_custom_call.1} parent=1 // pred_fallthru
      _
    %s27 = sadd.s32 0, 0
    %p28 = scmp.lt.s32.totalorder %s27, 0
    %s29 = scalar_select %p28, %s27, 0
    %s30 = smul.u32 8, %s29
    %p31 = scmp.eq.s32.totalorder 0, 0
    // Predicated region
    $region10: #{tpu_custom_call.1} parent=1 // pred_check
      %p32 = pneg %p31
    $region11: #{tpu_custom_call.1} parent=1 // pred_check_branch
      %34 = sbr.rel (%p32) target = $region13
    $region12: #{tpu_custom_call.1} parent=1 // pred_region
      %35 = vst [vmem:[#allocation2] sm:$0x3] 0.0
    $region13: #{tpu_custom_call.1} parent=1 // pred_fallthru
      _
    %v36 = vld [vmem:[#allocation3] sm:$0xff]
    %v37 = vld [vmem:[#allocation3 + $0x8] sm:$0xff]
    %v39 = vrot.slane %v36, 2
    %v41 = vadd.f32 %v36, %v39
    %v42 = vrot.slane %v36, 4
    %v44 = vadd.f32 %v41, %v42
    %v45 = vrot.slane %v36, 6
    %v47 = vadd.f32 %v44, %v45
    %v48 = vadd.f32 %v47, %v37
    %v50 = vrot.slane %v37, 2
    %v52 = vadd.f32 %v48, %v50
    %v53 = vrot.slane %v37, 4
    %v55 = vadd.f32 %v52, %v53
    %v56 = vrot.slane %v37, 6
    %v58 = vadd.f32 %v55, %v56
    %v59 = vld [vmem:[#allocation2] sm:$0x3]
    %v60 = vadd.f32 %v59, %v58
    %61 = vst [vmem:[#allocation2] sm:$0x3] %v60
    // Predicated region
    $region14: #{tpu_custom_call.1} parent=1 // pred_check
      %p62 = pneg %p31
    $region15: #{tpu_custom_call.1} parent=1 // pred_check_branch
      %64 = sbr.rel (%p62) target = $region17
    $region16: #{tpu_custom_call.1} parent=1 // pred_region
      %v65 = vld [vmem:[#allocation2] sm:$0x3]
      %66 = vst [vmem:[#allocation6] sm:$0x3] %v65
    $region17: #{tpu_custom_call.1} parent=1 // pred_fallthru
      _
    // Predicated region
    $region18: #{tpu_custom_call.1} parent=1 // pred_check
      _
    $region19: #{tpu_custom_call.1} parent=1 // pred_check_branch
      %68 = sbr.rel (0) target = $region21
    $region20: #{tpu_custom_call.1} parent=1 // pred_region
      %s70 = ssub.s32 32, 32
      %71 = vsyncadd [#allocation5], %s70
      %s73 = sshll.u32 [#allocation6], 4
      %s74 = int_to_ptr.vmem [resolvable:$true] %s73
      %76 = dma.vmem_to_hbm [thread:$0]  %s74, 32, %s1, [#allocation5]
    $region21: #{tpu_custom_call.1} parent=1 // pred_fallthru
      _
    // Predicated region
    $region22: #{tpu_custom_call.1} parent=1 // pred_check
      _
    $region23: #{tpu_custom_call.1} parent=1 // pred_check_branch
      %78 = sbr.rel (0) target = $region25
    $region24: #{tpu_custom_call.1} parent=1 // pred_region
      %79 = dma.done [#allocation5], 32
    $region25: #{tpu_custom_call.1} parent=1 // pred_fallthru
      _
    %80 = vsyncpa [#allocation4], 1
    %81 = vsyncpa [#allocation5], 1

</llo_original>
